<compile_context>
chip_gen: v7x
topology: tpu7x:2x2x1
jax: 0.10.0
libtpu: 0.0.40
codegen_flags: <defaults>
</compile_context>

<pallas_src>
import functools

import jax
import jax.numpy as jnp
from jax.experimental import pallas as pl
from jax.experimental.pallas import tpu as pltpu


def _round_up(x, m):
    return ((x + m - 1) // m) * m


def _activation(h, acti):
    # Only the selected (static) branch is traced into the kernel.
    if acti == "relu":
        return jnp.maximum(h, 0.0)
    if acti == "leakyrelu":
        return jnp.where(h > 0, h, 0.01 * h)
    if acti == "softplus":
        return jnp.maximum(h, 0.0) + jnp.log(1.0 + jnp.exp(-jnp.abs(h)))
    raise ValueError(f"unknown activation: {acti}")


def _decoder_kernel(num_layer, acti, x_ref, wh_ref, bh_ref, wo_ref, bo_ref, o_ref):
    """Fused MLP decoder for one batch tile.

    x_ref : (bt, R)     f32   unpadded rep_dim; ragged last tile masked by Pallas
    wh_ref: (L, R, R)   bf16  grid-constant, VMEM-resident
    bh_ref: (L, 1, R)   f32
    wo_ref: (R, Dp)     bf16  output feature dim padded to a lane multiple
    bo_ref: (1, Dp)     f32
    o_ref : (bt, Dp)    f32   lane-dense store
    """
    h = x_ref[...]                       # f32 activations
    for i in range(num_layer):           # small static layer count -> unrolled
        h = jnp.dot(h.astype(jnp.bfloat16), wh_ref[i],
                    preferred_element_type=jnp.float32) + bh_ref[i]
        h = _activation(h, acti)
    logits = jnp.dot(h.astype(jnp.bfloat16), wo_ref[...],
                     preferred_element_type=jnp.float32) + bo_ref[...]
    # Sigmoid: exp on the EUP + approximate reciprocal (EUP slot), keeping the
    # VALU / store slots free for the lane-dense output store.
    o_ref[...] = pl.reciprocal(1.0 + jnp.exp(-logits), approx=True)


def prepare_decoder_params(hidden_w, hidden_b, out_w, out_b):
    """One-time (per-model) parameter prep, hoisted out of the per-call path.

    hidden_w: (L, rep_dim, rep_dim)  PyTorch nn.Linear layout (out_feat, in_feat)
    hidden_b: (L, rep_dim)
    out_w   : (input_dim, rep_dim)
    out_b   : (input_dim,)
    """
    num_layer, rep_dim, _ = hidden_w.shape
    input_dim = out_w.shape[0]
    dp = _round_up(input_dim, 128)  # lane-dense output store
    wh = jnp.transpose(hidden_w, (0, 2, 1)).astype(jnp.bfloat16)      # (L, in, out)
    bh = hidden_b.reshape(num_layer, 1, rep_dim).astype(jnp.float32)
    wo = (jnp.zeros((rep_dim, dp), jnp.bfloat16)
          .at[:, :input_dim].set(out_w.T.astype(jnp.bfloat16)))       # (in, out_p)
    bo = (jnp.zeros((1, dp), jnp.float32)
          .at[:, :input_dim].set(out_b.astype(jnp.float32)))
    return wh, bh, wo, bo, input_dim


def decoder_net_pallas(x, params, *, batch_tile=1024, acti="relu"):
    """x: (B, rep_dim) float32 -> (B, input_dim) float32 in [0, 1]."""
    wh, bh, wo, bo, input_dim = params
    num_layer, rep_dim = wh.shape[0], wh.shape[1]
    B = x.shape[0]
    dp = wo.shape[1]

    x = x.astype(jnp.float32)

    # Batch tiling: multiple of 8 sublanes, no batch padding (Pallas masks the
    # ragged last tile's writes).
    bt = _round_up(max(8, min(batch_tile, _round_up(B, 8))), 8)
    num_tiles = pl.cdiv(B, bt)
    # If everything fits in one tile but the batch can be split, use two tiles
    # so the "parallel" axis can shard across both TensorCores on v7x.
    if num_tiles == 1 and B >= 16:
        bt = _round_up(pl.cdiv(B, 2), 8)
        num_tiles = pl.cdiv(B, bt)

    kernel = functools.partial(_decoder_kernel, num_layer, acti)

    def run(weight_pipeline_mode):
        wspec = ({} if weight_pipeline_mode is None
                 else {"pipeline_mode": weight_pipeline_mode})
        return pl.pallas_call(
            kernel,
            out_shape=jax.ShapeDtypeStruct((B, dp), jnp.float32),
            grid=(num_tiles,),
            in_specs=[
                # Activation tile varies with the grid step (double-buffered);
                # last block dim == full array dim -> no K padding of x.
                pl.BlockSpec((bt, rep_dim), lambda i: (i, 0)),
                # Weights / biases: constant index_map -> fetched once,
                # VMEM-resident across all grid steps.
                pl.BlockSpec((num_layer, rep_dim, rep_dim),
                             lambda i: (0, 0, 0), **wspec),
                pl.BlockSpec((num_layer, 1, rep_dim),
                             lambda i: (0, 0, 0), **wspec),
                pl.BlockSpec((rep_dim, dp), lambda i: (0, 0), **wspec),
                pl.BlockSpec((1, dp), lambda i: (0, 0), **wspec),
            ],
            out_specs=pl.BlockSpec((bt, dp), lambda i: (i, 0)),
            # No vmem_limit_bytes override: the 32 MiB scoped default fits this
            # kernel on every generation and never over-claims v7x's 64 MiB.
            compiler_params=pltpu.CompilerParams(
                dimension_semantics=("parallel",)),
        )(x, wh, bh, wo, bo)

    try:
        # Weight blocks never change index -> a single pipeline buffer is
        # enough (matters for large rep_dim against v7x's 64 MiB VMEM).
        out = run(pl.Buffered(1))
    except Exception:
        # pl.Buffered(1) unsupported on this JAX version -> default buffering.
        out = run(None)

    if dp != input_dim:
        # Only when input_dim is not a multiple of 128: drop the padded
        # sigmoid(0)=0.5 columns (small copy; absent for lane-multiple dims).
        out = out[:, :input_dim]
    return out


def decoder_net_ref(x, hidden_w, hidden_b, out_w, out_b):
    """Pure-JAX f32 reference of the PyTorch forward pass (acti='relu')."""
    h = x
    for i in range(hidden_w.shape[0]):
        h = jnp.maximum(h @ hidden_w[i].T + hidden_b[i], 0.0)
    return jax.nn.sigmoid(h @ out_w.T + out_b)


if __name__ == "__main__":
    # Small shapes consistent with the module's forward pass.
    num_layer = 2
    rep_dim = 32
    input_dim = 128   # lane multiple -> fully copy-free output path
    batch = 8

    key = jax.random.PRNGKey(0)
    k_x, k_hw, k_hb, k_ow, k_ob = jax.random.split(key, 5)

    # Deterministic synthetic parameters in PyTorch nn.Linear layout.
    x = jax.random.normal(k_x, (batch, rep_dim), dtype=jnp.float32)
    hidden_w = 0.1 * jax.random.normal(k_hw, (num_layer, rep_dim, rep_dim),
                                       dtype=jnp.float32)
    hidden_b = 0.1 * jax.random.normal(k_hb, (num_layer, rep_dim),
                                       dtype=jnp.float32)
    out_w = 0.1 * jax.random.normal(k_ow, (input_dim, rep_dim), dtype=jnp.float32)
    out_b = 0.1 * jax.random.normal(k_ob, (input_dim,), dtype=jnp.float32)

    # One-time parameter prep (transposed / stacked / padded / bf16).
    params = prepare_decoder_params(hidden_w, hidden_b, out_w, out_b)

    out = jax.block_until_ready(decoder_net_pallas(x, params, acti="relu"))

    ref = decoder_net_ref(x, hidden_w, hidden_b, out_w, out_b)
    assert out.shape == (batch, input_dim), out.shape
    max_err = float(jnp.max(jnp.abs(out - ref)))
    # bf16 weights / bf16 dot inputs (f32 accumulate) -> loosened tolerance.
    assert max_err < 2e-2, f"mismatch vs JAX reference, max abs err = {max_err}"

    print("KERNEL_OK")
</pallas_src>

<mosaic_0001>
module attributes {stable_mosaic.version = 11 : i64} {
  func.func @_decoder_kernel(%arg0: i32, %arg1: memref<8x32xf32, #tpu.memory_space<vmem>>, %arg2: memref<2x32x32xbf16, #tpu.memory_space<vmem>>, %arg3: memref<2x1x32xf32, #tpu.memory_space<vmem>>, %arg4: memref<32x128xbf16, #tpu.memory_space<vmem>>, %arg5: memref<1x128xf32, #tpu.memory_space<vmem>>, %arg6: memref<8x128xf32, #tpu.memory_space<vmem>>) attributes {dimension_semantics = [#tpu.dimension_semantics<parallel>], iteration_bounds = array<i64: 1>, scalar_prefetch = 0 : i64, scratch_operands = 0 : i64, tpu.core_type = #tpu.core_type<tc>, window_params = [{transform_indices = @transform_0, window_bounds = array<i64: 8, 32>}, {pipeline_mode = #tpu.pipeline_mode<synchronous>, transform_indices = @transform_1, window_bounds = array<i64: 2, 32, 32>}, {pipeline_mode = #tpu.pipeline_mode<synchronous>, transform_indices = @transform_2, window_bounds = array<i64: 2, 1, 32>}, {pipeline_mode = #tpu.pipeline_mode<synchronous>, transform_indices = @transform_3, window_bounds = array<i64: 32, 128>}, {pipeline_mode = #tpu.pipeline_mode<synchronous>, transform_indices = @transform_4, window_bounds = array<i64: 1, 128>}, {transform_indices = @transform_5, window_bounds = array<i64: 8, 128>}]} {
    %c0 = arith.constant 0 : index
    %c0_0 = arith.constant 0 : index
    %0 = vector.load %arg1[%c0, %c0_0] : memref<8x32xf32, #tpu.memory_space<vmem>>, vector<8x32xf32>
    %1 = arith.truncf %0 : vector<8x32xf32> to vector<8x32xbf16>
    %c0_1 = arith.constant 0 : index
    %c0_2 = arith.constant 0 : index
    %c0_3 = arith.constant 0 : index
    %2 = vector.load %arg2[%c0_1, %c0_2, %c0_3] : memref<2x32x32xbf16, #tpu.memory_space<vmem>>, vector<1x32x32xbf16>
    %3 = vector.shape_cast %2 : vector<1x32x32xbf16> to vector<32x32xbf16>
    %cst = arith.constant dense<0.000000e+00> : vector<8x32xf32>
    %4 = tpu.matmul %1, %3, %cst {dimension_numbers = #tpu.dot_dimension_numbers<[1], [0], [0], [1], [0, 0, 1, 1], [], []>} : vector<8x32xbf16>, vector<32x32xbf16>, vector<8x32xf32> -> vector<8x32xf32>
    %c0_4 = arith.constant 0 : index
    %c0_5 = arith.constant 0 : index
    %c0_6 = arith.constant 0 : index
    %5 = vector.load %arg3[%c0_4, %c0_5, %c0_6] : memref<2x1x32xf32, #tpu.memory_space<vmem>>, vector<1x1x32xf32>
    %6 = vector.shape_cast %5 : vector<1x1x32xf32> to vector<1x32xf32>
    %7 = vector.broadcast %6 : vector<1x32xf32> to vector<8x32xf32>
    %8 = arith.addf %4, %7 : vector<8x32xf32>
    %cst_7 = arith.constant 0.000000e+00 : f32
    %9 = vector.broadcast %cst_7 : f32 to vector<8x32xf32>
    %10 = arith.maximumf %8, %9 : vector<8x32xf32>
    %11 = arith.truncf %10 : vector<8x32xf32> to vector<8x32xbf16>
    %c1 = arith.constant 1 : index
    %c0_8 = arith.constant 0 : index
    %c0_9 = arith.constant 0 : index
    %12 = vector.load %arg2[%c1, %c0_8, %c0_9] : memref<2x32x32xbf16, #tpu.memory_space<vmem>>, vector<1x32x32xbf16>
    %13 = vector.shape_cast %12 : vector<1x32x32xbf16> to vector<32x32xbf16>
    %cst_10 = arith.constant dense<0.000000e+00> : vector<8x32xf32>
    %14 = tpu.matmul %11, %13, %cst_10 {dimension_numbers = #tpu.dot_dimension_numbers<[1], [0], [0], [1], [0, 0, 1, 1], [], []>} : vector<8x32xbf16>, vector<32x32xbf16>, vector<8x32xf32> -> vector<8x32xf32>
    %c1_11 = arith.constant 1 : index
    %c0_12 = arith.constant 0 : index
    %c0_13 = arith.constant 0 : index
    %15 = vector.load %arg3[%c1_11, %c0_12, %c0_13] : memref<2x1x32xf32, #tpu.memory_space<vmem>>, vector<1x1x32xf32>
    %16 = vector.shape_cast %15 : vector<1x1x32xf32> to vector<1x32xf32>
    %17 = vector.broadcast %16 : vector<1x32xf32> to vector<8x32xf32>
    %18 = arith.addf %14, %17 : vector<8x32xf32>
    %cst_14 = arith.constant 0.000000e+00 : f32
    %19 = vector.broadcast %cst_14 : f32 to vector<8x32xf32>
    %20 = arith.maximumf %18, %19 : vector<8x32xf32>
    %21 = arith.truncf %20 : vector<8x32xf32> to vector<8x32xbf16>
    %c0_15 = arith.constant 0 : index
    %c0_16 = arith.constant 0 : index
    %22 = vector.load %arg4[%c0_15, %c0_16] : memref<32x128xbf16, #tpu.memory_space<vmem>>, vector<32x128xbf16>
    %cst_17 = arith.constant dense<0.000000e+00> : vector<8x128xf32>
    %23 = tpu.matmul %21, %22, %cst_17 {dimension_numbers = #tpu.dot_dimension_numbers<[1], [0], [0], [1], [0, 0, 1, 1], [], []>} : vector<8x32xbf16>, vector<32x128xbf16>, vector<8x128xf32> -> vector<8x128xf32>
    %c0_18 = arith.constant 0 : index
    %c0_19 = arith.constant 0 : index
    %24 = vector.load %arg5[%c0_18, %c0_19] : memref<1x128xf32, #tpu.memory_space<vmem>>, vector<1x128xf32>
    %25 = vector.broadcast %24 : vector<1x128xf32> to vector<8x128xf32>
    %26 = arith.addf %23, %25 : vector<8x128xf32>
    %cst_20 = arith.constant 0.000000e+00 : f32
    %27 = vector.broadcast %cst_20 : f32 to vector<8x128xf32>
    %28 = arith.subf %27, %26 : vector<8x128xf32>
    %29 = math.exp %28 : vector<8x128xf32>
    %cst_21 = arith.constant 1.000000e+00 : f32
    %30 = vector.broadcast %cst_21 : f32 to vector<8x128xf32>
    %31 = arith.addf %30, %29 : vector<8x128xf32>
    %32 = tpu.reciprocal %31 {approx = true} : vector<8x128xf32> -> vector<8x128xf32>
    %c0_22 = arith.constant 0 : index
    %c0_23 = arith.constant 0 : index
    %33 = vector.load %arg6[%c0_22, %c0_23] : memref<8x128xf32, #tpu.memory_space<vmem>>, vector<8x128xf32>
    tpu.vector_store %arg6[%c0_22, %c0_23], %32 {strides = array<i32>} : memref<8x128xf32, #tpu.memory_space<vmem>>, vector<8x128xf32>,
    return
  }
  func.func @transform_0(%arg0: i32) -> (i32, i32) {
    %c0_i32 = arith.constant 0 : i32
    %c0_i32_0 = arith.constant 0 : i32
    return %arg0, %c0_i32 : i32, i32
  }
  func.func @transform_1(%arg0: i32) -> (i32, i32, i32) {
    %c0_i32 = arith.constant 0 : i32
    %c0_i32_0 = arith.constant 0 : i32
    %c0_i32_1 = arith.constant 0 : i32
    %c0_i32_2 = arith.constant 0 : i32
    return %c0_i32, %c0_i32_0, %c0_i32_1 : i32, i32, i32
  }
  func.func @transform_2(%arg0: i32) -> (i32, i32, i32) {
    %c0_i32 = arith.constant 0 : i32
    %c0_i32_0 = arith.constant 0 : i32
    %c0_i32_1 = arith.constant 0 : i32
    %c0_i32_2 = arith.constant 0 : i32
    return %c0_i32, %c0_i32_0, %c0_i32_1 : i32, i32, i32
  }
  func.func @transform_3(%arg0: i32) -> (i32, i32) {
    %c0_i32 = arith.constant 0 : i32
    %c0_i32_0 = arith.constant 0 : i32
    %c0_i32_1 = arith.constant 0 : i32
    return %c0_i32, %c0_i32_0 : i32, i32
  }
  func.func @transform_4(%arg0: i32) -> (i32, i32) {
    %c0_i32 = arith.constant 0 : i32
    %c0_i32_0 = arith.constant 0 : i32
    %c0_i32_1 = arith.constant 0 : i32
    return %c0_i32, %c0_i32_0 : i32, i32
  }
  func.func @transform_5(%arg0: i32) -> (i32, i32) {
    %c0_i32 = arith.constant 0 : i32
    %c0_i32_0 = arith.constant 0 : i32
    return %arg0, %c0_i32 : i32, i32
  }
}

module attributes {stable_mosaic.version = 11 : i64} {
  func.func @_decoder_kernel(%arg0: i32, %arg1: memref<8x32xf32, #tpu.memory_space<vmem>>, %arg2: memref<2x32x32xbf16, #tpu.memory_space<vmem>>, %arg3: memref<2x1x32xf32, #tpu.memory_space<vmem>>, %arg4: memref<32x128xbf16, #tpu.memory_space<vmem>>, %arg5: memref<1x128xf32, #tpu.memory_space<vmem>>, %arg6: memref<8x128xf32, #tpu.memory_space<vmem>>) attributes {dimension_semantics = [#tpu.dimension_semantics<parallel>], iteration_bounds = array<i64: 1>, scalar_prefetch = 0 : i64, scratch_operands = 0 : i64, tpu.core_type = #tpu.core_type<tc>, window_params = [{transform_indices = @transform_0, window_bounds = array<i64: 8, 32>}, {pipeline_mode = #tpu.pipeline_mode<synchronous>, transform_indices = @transform_1, window_bounds = array<i64: 2, 32, 32>}, {pipeline_mode = #tpu.pipeline_mode<synchronous>, transform_indices = @transform_2, window_bounds = array<i64: 2, 1, 32>}, {pipeline_mode = #tpu.pipeline_mode<synchronous>, transform_indices = @transform_3, window_bounds = array<i64: 32, 128>}, {pipeline_mode = #tpu.pipeline_mode<synchronous>, transform_indices = @transform_4, window_bounds = array<i64: 1, 128>}, {transform_indices = @transform_5, window_bounds = array<i64: 8, 128>}]} {
    %c0 = arith.constant 0 : index
    %c0_0 = arith.constant 0 : index
    %0 = vector.load %arg1[%c0, %c0_0] : memref<8x32xf32, #tpu.memory_space<vmem>>, vector<8x32xf32>
    %1 = arith.truncf %0 : vector<8x32xf32> to vector<8x32xbf16>
    %c0_1 = arith.constant 0 : index
    %c0_2 = arith.constant 0 : index
    %c0_3 = arith.constant 0 : index
    %2 = vector.load %arg2[%c0_1, %c0_2, %c0_3] : memref<2x32x32xbf16, #tpu.memory_space<vmem>>, vector<1x32x32xbf16>
    %3 = vector.shape_cast %2 : vector<1x32x32xbf16> to vector<32x32xbf16>
    %cst = arith.constant dense<0.000000e+00> : vector<8x32xf32>
    %4 = tpu.matmul %1, %3, %cst {dimension_numbers = #tpu.dot_dimension_numbers<[1], [0], [0], [1], [0, 0, 1, 1], [], []>} : vector<8x32xbf16>, vector<32x32xbf16>, vector<8x32xf32> -> vector<8x32xf32>
    %c0_4 = arith.constant 0 : index
    %c0_5 = arith.constant 0 : index
    %c0_6 = arith.constant 0 : index
    %5 = vector.load %arg3[%c0_4, %c0_5, %c0_6] : memref<2x1x32xf32, #tpu.memory_space<vmem>>, vector<1x1x32xf32>
    %6 = vector.shape_cast %5 : vector<1x1x32xf32> to vector<1x32xf32>
    %7 = vector.broadcast %6 : vector<1x32xf32> to vector<8x32xf32>
    %8 = arith.addf %4, %7 : vector<8x32xf32>
    %cst_7 = arith.constant 0.000000e+00 : f32
    %9 = vector.broadcast %cst_7 : f32 to vector<8x32xf32>
    %10 = arith.maximumf %8, %9 : vector<8x32xf32>
    %11 = arith.truncf %10 : vector<8x32xf32> to vector<8x32xbf16>
    %c1 = arith.constant 1 : index
    %c0_8 = arith.constant 0 : index
    %c0_9 = arith.constant 0 : index
    %12 = vector.load %arg2[%c1, %c0_8, %c0_9] : memref<2x32x32xbf16, #tpu.memory_space<vmem>>, vector<1x32x32xbf16>
    %13 = vector.shape_cast %12 : vector<1x32x32xbf16> to vector<32x32xbf16>
    %cst_10 = arith.constant dense<0.000000e+00> : vector<8x32xf32>
    %14 = tpu.matmul %11, %13, %cst_10 {dimension_numbers = #tpu.dot_dimension_numbers<[1], [0], [0], [1], [0, 0, 1, 1], [], []>} : vector<8x32xbf16>, vector<32x32xbf16>, vector<8x32xf32> -> vector<8x32xf32>
    %c1_11 = arith.constant 1 : index
    %c0_12 = arith.constant 0 : index
    %c0_13 = arith.constant 0 : index
    %15 = vector.load %arg3[%c1_11, %c0_12, %c0_13] : memref<2x1x32xf32, #tpu.memory_space<vmem>>, vector<1x1x32xf32>
    %16 = vector.shape_cast %15 : vector<1x1x32xf32> to vector<1x32xf32>
    %17 = vector.broadcast %16 : vector<1x32xf32> to vector<8x32xf32>
    %18 = arith.addf %14, %17 : vector<8x32xf32>
    %cst_14 = arith.constant 0.000000e+00 : f32
    %19 = vector.broadcast %cst_14 : f32 to vector<8x32xf32>
    %20 = arith.maximumf %18, %19 : vector<8x32xf32>
    %21 = arith.truncf %20 : vector<8x32xf32> to vector<8x32xbf16>
    %c0_15 = arith.constant 0 : index
    %c0_16 = arith.constant 0 : index
    %22 = vector.load %arg4[%c0_15, %c0_16] : memref<32x128xbf16, #tpu.memory_space<vmem>>, vector<32x128xbf16>
    %cst_17 = arith.constant dense<0.000000e+00> : vector<8x128xf32>
    %23 = tpu.matmul %21, %22, %cst_17 {dimension_numbers = #tpu.dot_dimension_numbers<[1], [0], [0], [1], [0, 0, 1, 1], [], []>} : vector<8x32xbf16>, vector<32x128xbf16>, vector<8x128xf32> -> vector<8x128xf32>
    %c0_18 = arith.constant 0 : index
    %c0_19 = arith.constant 0 : index
    %24 = vector.load %arg5[%c0_18, %c0_19] : memref<1x128xf32, #tpu.memory_space<vmem>>, vector<1x128xf32>
    %25 = vector.broadcast %24 : vector<1x128xf32> to vector<8x128xf32>
    %26 = arith.addf %23, %25 : vector<8x128xf32>
    %cst_20 = arith.constant 0.000000e+00 : f32
    %27 = vector.broadcast %cst_20 : f32 to vector<8x128xf32>
    %28 = arith.subf %27, %26 : vector<8x128xf32>
    %29 = math.exp %28 : vector<8x128xf32>
    %cst_21 = arith.constant 1.000000e+00 : f32
    %30 = vector.broadcast %cst_21 : f32 to vector<8x128xf32>
    %31 = arith.addf %30, %29 : vector<8x128xf32>
    %32 = tpu.reciprocal %31 {approx = true} : vector<8x128xf32> -> vector<8x128xf32>
    %c0_22 = arith.constant 0 : index
    %c0_23 = arith.constant 0 : index
    %33 = vector.load %arg6[%c0_22, %c0_23] : memref<8x128xf32, #tpu.memory_space<vmem>>, vector<8x128xf32>
    tpu.vector_store %arg6[%c0_22, %c0_23], %32 {strides = array<i32>} : memref<8x128xf32, #tpu.memory_space<vmem>>, vector<8x128xf32>,
    return
  }
  func.func @transform_0(%arg0: i32) -> (i32, i32) {
    %c0_i32 = arith.constant 0 : i32
    %c0_i32_0 = arith.constant 0 : i32
    return %arg0, %c0_i32 : i32, i32
  }
  func.func @transform_1(%arg0: i32) -> (i32, i32, i32) {
    %c0_i32 = arith.constant 0 : i32
    %c0_i32_0 = arith.constant 0 : i32
    %c0_i32_1 = arith.constant 0 : i32
    %c0_i32_2 = arith.constant 0 : i32
    return %c0_i32, %c0_i32_0, %c0_i32_1 : i32, i32, i32
  }
  func.func @transform_2(%arg0: i32) -> (i32, i32, i32) {
    %c0_i32 = arith.constant 0 : i32
    %c0_i32_0 = arith.constant 0 : i32
    %c0_i32_1 = arith.constant 0 : i32
    %c0_i32_2 = arith.constant 0 : i32
    return %c0_i32, %c0_i32_0, %c0_i32_1 : i32, i32, i32
  }
  func.func @transform_3(%arg0: i32) -> (i32, i32) {
    %c0_i32 = arith.constant 0 : i32
    %c0_i32_0 = arith.constant 0 : i32
    %c0_i32_1 = arith.constant 0 : i32
    return %c0_i32, %c0_i32_0 : i32, i32
  }
  func.func @transform_4(%arg0: i32) -> (i32, i32) {
    %c0_i32 = arith.constant 0 : i32
    %c0_i32_0 = arith.constant 0 : i32
    %c0_i32_1 = arith.constant 0 : i32
    return %c0_i32, %c0_i32_0 : i32, i32
  }
  func.func @transform_5(%arg0: i32) -> (i32, i32) {
    %c0_i32 = arith.constant 0 : i32
    %c0_i32_0 = arith.constant 0 : i32
    return %arg0, %c0_i32 : i32, i32
  }
}

</mosaic_0001>

<llo_original>
// kernel: tpu_custom_call.1
$region0: #{tpu_custom_call.1}
  #allocation0 [shape = 'u32[]', space=smem, size = 0x4, offset = 0x4, fixed_abs, tag = 'smem constant byte address 0x4 - core index']
  #allocation1 [shape = 'u32[144,128]{1,0:T(1,128)}', space=vmem, size = 0x12000, scoped, tag = 'internal scratch']
  %s0 = inlined_call_operand.hbm [shape: f32[8,32], index: 0, kind: input, shape index: {}]
  %s1 = inlined_call_operand.hbm [shape: bf16[2,32,32], index: 1, kind: input, shape index: {}]
  %s2 = inlined_call_operand.vmem [shape: f32[2,1,32], index: 2, kind: input, shape index: {}]
  %s3 = inlined_call_operand.hbm [shape: bf16[32,128], index: 3, kind: input, shape index: {}]
  %s4 = inlined_call_operand.vmem [shape: f32[1,128], index: 4, kind: input, shape index: {}]
  %s5 = inlined_call_operand.hbm [shape: f32[8,128], index: 5, kind: output, shape index: {}]
  %s6 = sld [smem:[#allocation0]]
  $region42: #{tpu_custom_call.1} parent=0
    _
  %s8 = ssub.s32 1, %s6
  %s9 = scalar_select 0, %s8, %s6
  $region1: #{tpu_custom_call.1} parent=0
    #allocation2 [shape = 'u8[4096]{0}', space=vmem, size = 0x1000, scoped, tag = 'input window, operand 0, single buffered']
    #allocation3 [shape = 's32[1]{0}', space=sflag, size = 0x4, scoped, tag = 'scoped memory for tpu_custom_call.1']
    #allocation4 [shape = 's32[1]{0}', space=sflag, size = 0x4, scoped, tag = 'scoped memory for tpu_custom_call.1']
    #allocation5 [shape = 'u8[16384]{0}', space=vmem, size = 0x4000, scoped, tag = 'input window, operand 1, single buffered']
    #allocation6 [shape = 's32[1]{0}', space=sflag, size = 0x4, scoped, tag = 'scoped memory for tpu_custom_call.1']
    #allocation7 [shape = 'u8[8192]{0}', space=vmem, size = 0x2000, scoped, tag = 'input window, operand 3, single buffered']
    #allocation8 [shape = 'u8[4096]{0}', space=vmem, size = 0x1000, scoped, tag = 'output window, operand 0, single buffered']
    %10 = vsyncpa [#allocation3], 0
    %11 = vsyncpa [#allocation6], 0
    %12 = vsyncpa [#allocation4], 0
    // Predicated region
    $region2: #{tpu_custom_call.1} parent=1 // pred_check
      _
    $region3: #{tpu_custom_call.1} parent=1 // pred_check_branch
      %14 = sbr.rel (0) target = $region5
    $region4: #{tpu_custom_call.1} parent=1 // pred_region
      %s16 = ssub.s32 128, 128
      %17 = vsyncadd [#allocation3], %s16
      %s19 = sshll.u32 [#allocation2], 4
      %s20 = int_to_ptr.vmem [resolvable:$true] %s19
      %22 = dma.hbm_to_vmem [thread:$0]  %s0, 128, %s20, [#allocation3]
    $region5: #{tpu_custom_call.1} parent=1 // pred_fallthru
      _
    // Predicated region
    $region6: #{tpu_custom_call.1} parent=1 // pred_check
      _
    $region7: #{tpu_custom_call.1} parent=1 // pred_check_branch
      %24 = sbr.rel (0) target = $region9
    $region8: #{tpu_custom_call.1} parent=1 // pred_region
      %s26 = ssub.s32 512, 512
      %27 = vsyncadd [#allocation6], %s26
      %s28 = sshll.u32 [#allocation5], 4
      %s29 = int_to_ptr.vmem [resolvable:$true] %s28
      %34 = dma.hbm_to_vmem [thread:$0]  %s1, 512, %s29, [#allocation6], 64, 64, 4
    $region9: #{tpu_custom_call.1} parent=1 // pred_fallthru
      _
    // Predicated region
    $region10: #{tpu_custom_call.1} parent=1 // pred_check
      _
    $region11: #{tpu_custom_call.1} parent=1 // pred_check_branch
      %36 = sbr.rel (0) target = $region13
    $region12: #{tpu_custom_call.1} parent=1 // pred_region
      _
    $region13: #{tpu_custom_call.1} parent=1 // pred_fallthru
      _
    // Predicated region
    $region14: #{tpu_custom_call.1} parent=1 // pred_check
      _
    $region15: #{tpu_custom_call.1} parent=1 // pred_check_branch
      %38 = sbr.rel (0) target = $region17
    $region16: #{tpu_custom_call.1} parent=1 // pred_region
      %s40 = ssub.s32 256, 256
      %41 = vsyncadd [#allocation6], %s40
      %s42 = sshll.u32 [#allocation7], 4
      %s43 = int_to_ptr.vmem [resolvable:$true] %s42
      %48 = dma.hbm_to_vmem [thread:$0]  %s3, 256, %s43, [#allocation6], 64, 64, 4
    $region17: #{tpu_custom_call.1} parent=1 // pred_fallthru
      _
    // Predicated region
    $region18: #{tpu_custom_call.1} parent=1 // pred_check
      _
    $region19: #{tpu_custom_call.1} parent=1 // pred_check_branch
      %50 = sbr.rel (0) target = $region21
    $region20: #{tpu_custom_call.1} parent=1 // pred_region
      _
    $region21: #{tpu_custom_call.1} parent=1 // pred_fallthru
      _
    // Predicated region
    $region22: #{tpu_custom_call.1} parent=1 // pred_check
      _
    $region23: #{tpu_custom_call.1} parent=1 // pred_check_branch
      %52 = sbr.rel (0) target = $region25
    $region24: #{tpu_custom_call.1} parent=1 // pred_region
      %53 = dma.done [#allocation3], 128
    $region25: #{tpu_custom_call.1} parent=1 // pred_fallthru
      _
    // Predicated region
    $region26: #{tpu_custom_call.1} parent=1 // pred_check
      _
    $region27: #{tpu_custom_call.1} parent=1 // pred_check_branch
      %55 = sbr.rel (0) target = $region29
    $region28: #{tpu_custom_call.1} parent=1 // pred_region
      %56 = dma.done [#allocation6], 512
    $region29: #{tpu_custom_call.1} parent=1 // pred_fallthru
      _
    // Predicated region
    $region30: #{tpu_custom_call.1} parent=1 // pred_check
      _
    $region31: #{tpu_custom_call.1} parent=1 // pred_check_branch
      %58 = sbr.rel (0) target = $region33
    $region32: #{tpu_custom_call.1} parent=1 // pred_region
      %59 = dma.done [#allocation6], 256
    $region33: #{tpu_custom_call.1} parent=1 // pred_fallthru
      _
    %v61 = vld [vmem:[#allocation2] sm:$0xff]
    %v62 = vpack.c.bf16 %v61, %v61
    %v63 = vld [vmem:[#allocation5] sm:$0xf]
    %v64 = vld [vmem:[#allocation5 + $0x4] sm:$0xf]
    %v65 = vld [vmem:[#allocation5 + $0x8] sm:$0xf]
    %v66 = vld [vmem:[#allocation5 + $0xc] sm:$0xf]
    %v67 = vld [vmem:[%s2] sm:$0x1]
    %v69 = vlaneseq
    %v70 = vshrl.u32 %v69, 7
    %v71 = vsub.s32 0, %v70
    %v72 = vrot.slane %v67, %v71
    %v78 = vunpack.c.l.b16 %v63
    %v79 = vunpack.c.l.b16 %v64
    %v80 = vunpack.c.l.b16 %v65
    %v81 = vunpack.c.l.b16 %v66
    %v82 = vpack.c.b16 %v79, %v78
    %v83 = vpack.c.b16 %v81, %v80
    %vm86 = vcmask 261120
    %v88 = vsel %vm86, %v62, 0
    %90 = vmatprep.subr.bf16.mxu0 0
    %91 = vmatpush1.bf16.msra.mxu0 %v82
    %92 = vmatprep.subr.bf16.mxu0 0
    %93 = vmatpush1.bf16.msra.mxu0 %v83
    %94 = vmatprep.subr.bf16.mxu0 0
    %95 = vmatpush1.bf16.msra.mxu0 0
    %96 = vmatprep.subr.bf16.mxu0 0
    %97 = vmatpush1.bf16.msra.mxu0 0
    %98 = vmatprep.subr.bf16.mxu0 0
    %99 = vmatpush1.bf16.msra.mxu0 0
    %100 = vmatprep.subr.bf16.mxu0 0
    %101 = vmatpush1.bf16.msra.mxu0 0
    %102 = vmatprep.subr.bf16.mxu0 0
    %103 = vmatpush1.bf16.msra.mxu0 0
    %104 = vmatprep.subr.bf16.mxu0 0
    %105 = vmatpush1.bf16.msra.mxu0 0
    %106 = vmatprep.subr.bf16.mxu0 0
    %107 = vmatpush1.bf16.msra.mxu0 0
    %108 = vmatprep.subr.bf16.mxu0 0
    %109 = vmatpush1.bf16.msra.mxu0 0
    %110 = vmatprep.subr.bf16.mxu0 0
    %111 = vmatpush1.bf16.msra.mxu0 0
    %112 = vmatprep.subr.bf16.mxu0 0
    %113 = vmatpush1.bf16.msra.mxu0 0
    %114 = vmatprep.subr.bf16.mxu0 0
    %115 = vmatpush1.bf16.msra.mxu0 0
    %116 = vmatprep.subr.bf16.mxu0 0
    %117 = vmatpush1.bf16.msra.mxu0 0
    %118 = vmatprep.subr.bf16.mxu0 0
    %119 = vmatpush1.bf16.msra.mxu0 0
    %120 = vmatprep.subr.bf16.mxu0 0
    %121 = vmatpush1.bf16.msra.mxu0 0
    %122 = vmatprep.mubr.bf16.mxu0 0
    %123 = vmatmul.mubr.bf16.gmra.mrb[0].mxu0 %v88
    %v124 = vpop.f32.mrb[0].mxu0
    %v125 = vadd.f32 %v72, %v124
    %v126 = vpop.f32.mrb[0].mxu0
    %v127 = vpop.f32.mrb[0].mxu0
    %v128 = vpop.f32.mrb[0].mxu0
    %129 = vdwg.mxu0
    %v130 = vmax.f32 %v125, 0.0
    %v131 = vpack.c.bf16 %v130, %v130
    %s132 = scalar_lea.vmem [#allocation5], 16
    %v133 = vld [vmem:[%s132] sm:$0xf]
    %v134 = vld [vmem:[%s132 + $0x4] sm:$0xf]
    %v135 = vld [vmem:[%s132 + $0x8] sm:$0xf]
    %v136 = vld [vmem:[%s132 + $0xc] sm:$0xf]
    %s137 = scalar_lea.vmem %s2, 1
    %v138 = vld [vmem:[%s137] sm:$0x1]
    %v140 = vlaneseq
    %v141 = vshrl.u32 %v140, 7
    %v142 = vsub.s32 0, %v141
    %v143 = vrot.slane %v138, %v142
    %v149 = vunpack.c.l.b16 %v133
    %v150 = vunpack.c.l.b16 %v134
    %v151 = vunpack.c.l.b16 %v135
    %v152 = vunpack.c.l.b16 %v136
    %v153 = vpack.c.b16 %v150, %v149
    %v154 = vpack.c.b16 %v152, %v151
    %v158 = vsel %vm86, %v131, 0
    %160 = vmatprep.subr.bf16.mxu0 0
    %161 = vmatpush1.bf16.msra.mxu0 %v153
    %162 = vmatprep.subr.bf16.mxu0 0
    %163 = vmatpush1.bf16.msra.mxu0 %v154
    %164 = vmatprep.subr.bf16.mxu0 0
    %165 = vmatpush1.bf16.msra.mxu0 0
    %166 = vmatprep.subr.bf16.mxu0 0
    %167 = vmatpush1.bf16.msra.mxu0 0
    %168 = vmatprep.subr.bf16.mxu0 0
    %169 = vmatpush1.bf16.msra.mxu0 0
    %170 = vmatprep.subr.bf16.mxu0 0
    %171 = vmatpush1.bf16.msra.mxu0 0
    %172 = vmatprep.subr.bf16.mxu0 0
    %173 = vmatpush1.bf16.msra.mxu0 0
    %174 = vmatprep.subr.bf16.mxu0 0
    %175 = vmatpush1.bf16.msra.mxu0 0
    %176 = vmatprep.subr.bf16.mxu0 0
    %177 = vmatpush1.bf16.msra.mxu0 0
    %178 = vmatprep.subr.bf16.mxu0 0
    %179 = vmatpush1.bf16.msra.mxu0 0
    %180 = vmatprep.subr.bf16.mxu0 0
    %181 = vmatpush1.bf16.msra.mxu0 0
    %182 = vmatprep.subr.bf16.mxu0 0
    %183 = vmatpush1.bf16.msra.mxu0 0
    %184 = vmatprep.subr.bf16.mxu0 0
    %185 = vmatpush1.bf16.msra.mxu0 0
    %186 = vmatprep.subr.bf16.mxu0 0
    %187 = vmatpush1.bf16.msra.mxu0 0
    %188 = vmatprep.subr.bf16.mxu0 0
    %189 = vmatpush1.bf16.msra.mxu0 0
    %190 = vmatprep.subr.bf16.mxu0 0
    %191 = vmatpush1.bf16.msra.mxu0 0
    %192 = vmatprep.mubr.bf16.mxu0 0
    %193 = vmatmul.mubr.bf16.gmra.mrb[0].mxu0 %v158
    %v194 = vpop.f32.mrb[0].mxu0
    %v195 = vadd.f32 %v143, %v194
    %v196 = vpop.f32.mrb[0].mxu0
    %v197 = vpop.f32.mrb[0].mxu0
    %v198 = vpop.f32.mrb[0].mxu0
    %199 = vdwg.mxu0
    %v200 = vmax.f32 %v195, 0.0
    %v201 = vpack.c.bf16 %v200, %v200
    %v202 = vld [vmem:[#allocation7] sm:$0xf]
    %v203 = vld [vmem:[#allocation7 + $0x4] sm:$0xf]
    %v204 = vld [vmem:[#allocation7 + $0x8] sm:$0xf]
    %v205 = vld [vmem:[#allocation7 + $0xc] sm:$0xf]
    %v206 = vld [vmem:[%s4] sm:$0x1]
    %v208 = vlaneseq
    %v209 = vshrl.u32 %v208, 7
    %v210 = vsub.s32 0, %v209
    %v211 = vrot.slane %v206, %v210
    %v217 = vunpack.c.l.b16 %v202
    %v218 = vunpack.c.l.b16 %v203
    %v219 = vunpack.c.l.b16 %v204
    %v220 = vunpack.c.l.b16 %v205
    %v221 = vpack.c.b16 %v218, %v217
    %v222 = vpack.c.b16 %v220, %v219
    %v226 = vsel %vm86, %v201, 0
    %228 = vmatprep.subr.bf16.mxu0 0
    %229 = vmatpush1.bf16.msra.mxu0 %v221
    %230 = vmatprep.subr.bf16.mxu0 0
    %231 = vmatpush1.bf16.msra.mxu0 %v222
    %232 = vmatprep.subr.bf16.mxu0 0
    %233 = vmatpush1.bf16.msra.mxu0 0
    %234 = vmatprep.subr.bf16.mxu0 0
    %235 = vmatpush1.bf16.msra.mxu0 0
    %236 = vmatprep.subr.bf16.mxu0 0
    %237 = vmatpush1.bf16.msra.mxu0 0
    %238 = vmatprep.subr.bf16.mxu0 0
    %239 = vmatpush1.bf16.msra.mxu0 0
    %240 = vmatprep.subr.bf16.mxu0 0
    %241 = vmatpush1.bf16.msra.mxu0 0
    %242 = vmatprep.subr.bf16.mxu0 0
    %243 = vmatpush1.bf16.msra.mxu0 0
    %244 = vmatprep.subr.bf16.mxu0 0
    %245 = vmatpush1.bf16.msra.mxu0 0
    %246 = vmatprep.subr.bf16.mxu0 0
    %247 = vmatpush1.bf16.msra.mxu0 0
    %248 = vmatprep.subr.bf16.mxu0 0
    %249 = vmatpush1.bf16.msra.mxu0 0
    %250 = vmatprep.subr.bf16.mxu0 0
    %251 = vmatpush1.bf16.msra.mxu0 0
    %252 = vmatprep.subr.bf16.mxu0 0
    %253 = vmatpush1.bf16.msra.mxu0 0
    %254 = vmatprep.subr.bf16.mxu0 0
    %255 = vmatpush1.bf16.msra.mxu0 0
    %256 = vmatprep.subr.bf16.mxu0 0
    %257 = vmatpush1.bf16.msra.mxu0 0
    %258 = vmatprep.subr.bf16.mxu0 0
    %259 = vmatpush1.bf16.msra.mxu0 0
    %260 = vmatprep.mubr.bf16.mxu0 0
    %261 = vmatmul.mubr.bf16.gmra.mrb[0].mxu0 %v226
    %v262 = vpop.f32.mrb[0].mxu0
    %v263 = vadd.f32 %v211, %v262
    %v264 = vpop.f32.mrb[0].mxu0
    %v265 = vpop.f32.mrb[0].mxu0
    %v266 = vpop.f32.mrb[0].mxu0
    %267 = vdwg.mxu0
    %v268 = vsub.f32 0.0, %v263
    %v269 = vmul.f32 %v268, 1.442695
    %v270 = vpow.pop %v269
    %v271 = vadd.f32 %v270, 1.0
    %v272 = vrcp.pop %v271
    %273 = vst [vmem:[#allocation8] sm:$0xff] %v272
    // Predicated region
    $region34: #{tpu_custom_call.1} parent=1 // pred_check
      _
    $region35: #{tpu_custom_call.1} parent=1 // pred_check_branch
      %275 = sbr.rel (0) target = $region37
    $region36: #{tpu_custom_call.1} parent=1 // pred_region
      %s277 = ssub.s32 128, 128
      %278 = vsyncadd [#allocation4], %s277
      %s280 = sshll.u32 [#allocation8], 4
      %s281 = int_to_ptr.vmem [resolvable:$true] %s280
      %283 = dma.vmem_to_hbm [thread:$0]  %s281, 128, %s5, [#allocation4]
    $region37: #{tpu_custom_call.1} parent=1 // pred_fallthru
      _
    // Predicated region
    $region38: #{tpu_custom_call.1} parent=1 // pred_check
      _
    $region39: #{tpu_custom_call.1} parent=1 // pred_check_branch
      %285 = sbr.rel (0) target = $region41
    $region40: #{tpu_custom_call.1} parent=1 // pred_region
      %286 = dma.done [#allocation4], 128
    $region41: #{tpu_custom_call.1} parent=1 // pred_fallthru
      _
    %287 = vsyncpa [#allocation3], 1
    %288 = vsyncpa [#allocation6], 1
    %289 = vsyncpa [#allocation4], 1

// kernel: tpu_custom_call.1
$region0: #{tpu_custom_call.1}
  #allocation0 [shape = 'u32[]', space=smem, size = 0x4, offset = 0x4, fixed_abs, tag = 'smem constant byte address 0x4 - core index']
  #allocation1 [shape = 'u32[144,128]{1,0:T(1,128)}', space=vmem, size = 0x12000, scoped, tag = 'internal scratch']
  %s0 = inlined_call_operand.hbm [shape: f32[8,32], index: 0, kind: input, shape index: {}]
  %s1 = inlined_call_operand.hbm [shape: bf16[2,32,32], index: 1, kind: input, shape index: {}]
  %s2 = inlined_call_operand.vmem [shape: f32[2,1,32], index: 2, kind: input, shape index: {}]
  %s3 = inlined_call_operand.hbm [shape: bf16[32,128], index: 3, kind: input, shape index: {}]
  %s4 = inlined_call_operand.vmem [shape: f32[1,128], index: 4, kind: input, shape index: {}]
  %s5 = inlined_call_operand.hbm [shape: f32[8,128], index: 5, kind: output, shape index: {}]
  %s6 = sld [smem:[#allocation0]]
  $region42: #{tpu_custom_call.1} parent=0
    _
  %s8 = ssub.s32 1, %s6
  %s9 = scalar_select 0, %s8, %s6
  $region1: #{tpu_custom_call.1} parent=0
    #allocation2 [shape = 'u8[4096]{0}', space=vmem, size = 0x1000, scoped, tag = 'input window, operand 0, single buffered']
    #allocation3 [shape = 's32[1]{0}', space=sflag, size = 0x4, scoped, tag = 'scoped memory for tpu_custom_call.1']
    #allocation4 [shape = 's32[1]{0}', space=sflag, size = 0x4, scoped, tag = 'scoped memory for tpu_custom_call.1']
    #allocation5 [shape = 'u8[16384]{0}', space=vmem, size = 0x4000, scoped, tag = 'input window, operand 1, single buffered']
    #allocation6 [shape = 's32[1]{0}', space=sflag, size = 0x4, scoped, tag = 'scoped memory for tpu_custom_call.1']
    #allocation7 [shape = 'u8[8192]{0}', space=vmem, size = 0x2000, scoped, tag = 'input window, operand 3, single buffered']
    #allocation8 [shape = 'u8[4096]{0}', space=vmem, size = 0x1000, scoped, tag = 'output window, operand 0, single buffered']
    %10 = vsyncpa [#allocation3], 0
    %11 = vsyncpa [#allocation6], 0
    %12 = vsyncpa [#allocation4], 0
    // Predicated region
    $region2: #{tpu_custom_call.1} parent=1 // pred_check
      _
    $region3: #{tpu_custom_call.1} parent=1 // pred_check_branch
      %14 = sbr.rel (0) target = $region5
    $region4: #{tpu_custom_call.1} parent=1 // pred_region
      %s16 = ssub.s32 128, 128
      %17 = vsyncadd [#allocation3], %s16
      %s19 = sshll.u32 [#allocation2], 4
      %s20 = int_to_ptr.vmem [resolvable:$true] %s19
      %22 = dma.hbm_to_vmem [thread:$0]  %s0, 128, %s20, [#allocation3]
    $region5: #{tpu_custom_call.1} parent=1 // pred_fallthru
      _
    // Predicated region
    $region6: #{tpu_custom_call.1} parent=1 // pred_check
      _
    $region7: #{tpu_custom_call.1} parent=1 // pred_check_branch
      %24 = sbr.rel (0) target = $region9
    $region8: #{tpu_custom_call.1} parent=1 // pred_region
      %s26 = ssub.s32 512, 512
      %27 = vsyncadd [#allocation6], %s26
      %s28 = sshll.u32 [#allocation5], 4
      %s29 = int_to_ptr.vmem [resolvable:$true] %s28
      %34 = dma.hbm_to_vmem [thread:$0]  %s1, 512, %s29, [#allocation6], 64, 64, 4
    $region9: #{tpu_custom_call.1} parent=1 // pred_fallthru
      _
    // Predicated region
    $region10: #{tpu_custom_call.1} parent=1 // pred_check
      _
    $region11: #{tpu_custom_call.1} parent=1 // pred_check_branch
      %36 = sbr.rel (0) target = $region13
    $region12: #{tpu_custom_call.1} parent=1 // pred_region
      _
    $region13: #{tpu_custom_call.1} parent=1 // pred_fallthru
      _
    // Predicated region
    $region14: #{tpu_custom_call.1} parent=1 // pred_check
      _
    $region15: #{tpu_custom_call.1} parent=1 // pred_check_branch
      %38 = sbr.rel (0) target = $region17
    $region16: #{tpu_custom_call.1} parent=1 // pred_region
      %s40 = ssub.s32 256, 256
      %41 = vsyncadd [#allocation6], %s40
      %s42 = sshll.u32 [#allocation7], 4
      %s43 = int_to_ptr.vmem [resolvable:$true] %s42
      %48 = dma.hbm_to_vmem [thread:$0]  %s3, 256, %s43, [#allocation6], 64, 64, 4
    $region17: #{tpu_custom_call.1} parent=1 // pred_fallthru
      _
    // Predicated region
    $region18: #{tpu_custom_call.1} parent=1 // pred_check
      _
    $region19: #{tpu_custom_call.1} parent=1 // pred_check_branch
      %50 = sbr.rel (0) target = $region21
    $region20: #{tpu_custom_call.1} parent=1 // pred_region
      _
    $region21: #{tpu_custom_call.1} parent=1 // pred_fallthru
      _
    // Predicated region
    $region22: #{tpu_custom_call.1} parent=1 // pred_check
      _
    $region23: #{tpu_custom_call.1} parent=1 // pred_check_branch
      %52 = sbr.rel (0) target = $region25
    $region24: #{tpu_custom_call.1} parent=1 // pred_region
      %53 = dma.done [#allocation3], 128
    $region25: #{tpu_custom_call.1} parent=1 // pred_fallthru
      _
    // Predicated region
    $region26: #{tpu_custom_call.1} parent=1 // pred_check
      _
    $region27: #{tpu_custom_call.1} parent=1 // pred_check_branch
      %55 = sbr.rel (0) target = $region29
    $region28: #{tpu_custom_call.1} parent=1 // pred_region
      %56 = dma.done [#allocation6], 512
    $region29: #{tpu_custom_call.1} parent=1 // pred_fallthru
      _
    // Predicated region
    $region30: #{tpu_custom_call.1} parent=1 // pred_check
      _
    $region31: #{tpu_custom_call.1} parent=1 // pred_check_branch
      %58 = sbr.rel (0) target = $region33
    $region32: #{tpu_custom_call.1} parent=1 // pred_region
      %59 = dma.done [#allocation6], 256
    $region33: #{tpu_custom_call.1} parent=1 // pred_fallthru
      _
    %v61 = vld [vmem:[#allocation2] sm:$0xff]
    %v62 = vpack.c.bf16 %v61, %v61
    %v63 = vld [vmem:[#allocation5] sm:$0xf]
    %v64 = vld [vmem:[#allocation5 + $0x4] sm:$0xf]
    %v65 = vld [vmem:[#allocation5 + $0x8] sm:$0xf]
    %v66 = vld [vmem:[#allocation5 + $0xc] sm:$0xf]
    %v67 = vld [vmem:[%s2] sm:$0x1]
    %v69 = vlaneseq
    %v70 = vshrl.u32 %v69, 7
    %v71 = vsub.s32 0, %v70
    %v72 = vrot.slane %v67, %v71
    %v78 = vunpack.c.l.b16 %v63
    %v79 = vunpack.c.l.b16 %v64
    %v80 = vunpack.c.l.b16 %v65
    %v81 = vunpack.c.l.b16 %v66
    %v82 = vpack.c.b16 %v79, %v78
    %v83 = vpack.c.b16 %v81, %v80
    %vm86 = vcmask 261120
    %v88 = vsel %vm86, %v62, 0
    %90 = vmatprep.subr.bf16.mxu0 0
    %91 = vmatpush1.bf16.msra.mxu0 %v82
    %92 = vmatprep.subr.bf16.mxu0 0
    %93 = vmatpush1.bf16.msra.mxu0 %v83
    %94 = vmatprep.subr.bf16.mxu0 0
    %95 = vmatpush1.bf16.msra.mxu0 0
    %96 = vmatprep.subr.bf16.mxu0 0
    %97 = vmatpush1.bf16.msra.mxu0 0
    %98 = vmatprep.subr.bf16.mxu0 0
    %99 = vmatpush1.bf16.msra.mxu0 0
    %100 = vmatprep.subr.bf16.mxu0 0
    %101 = vmatpush1.bf16.msra.mxu0 0
    %102 = vmatprep.subr.bf16.mxu0 0
    %103 = vmatpush1.bf16.msra.mxu0 0
    %104 = vmatprep.subr.bf16.mxu0 0
    %105 = vmatpush1.bf16.msra.mxu0 0
    %106 = vmatprep.subr.bf16.mxu0 0
    %107 = vmatpush1.bf16.msra.mxu0 0
    %108 = vmatprep.subr.bf16.mxu0 0
    %109 = vmatpush1.bf16.msra.mxu0 0
    %110 = vmatprep.subr.bf16.mxu0 0
    %111 = vmatpush1.bf16.msra.mxu0 0
    %112 = vmatprep.subr.bf16.mxu0 0
    %113 = vmatpush1.bf16.msra.mxu0 0
    %114 = vmatprep.subr.bf16.mxu0 0
    %115 = vmatpush1.bf16.msra.mxu0 0
    %116 = vmatprep.subr.bf16.mxu0 0
    %117 = vmatpush1.bf16.msra.mxu0 0
    %118 = vmatprep.subr.bf16.mxu0 0
    %119 = vmatpush1.bf16.msra.mxu0 0
    %120 = vmatprep.subr.bf16.mxu0 0
    %121 = vmatpush1.bf16.msra.mxu0 0
    %122 = vmatprep.mubr.bf16.mxu0 0
    %123 = vmatmul.mubr.bf16.gmra.mrb[0].mxu0 %v88
    %v124 = vpop.f32.mrb[0].mxu0
    %v125 = vadd.f32 %v72, %v124
    %v126 = vpop.f32.mrb[0].mxu0
    %v127 = vpop.f32.mrb[0].mxu0
    %v128 = vpop.f32.mrb[0].mxu0
    %129 = vdwg.mxu0
    %v130 = vmax.f32 %v125, 0.0
    %v131 = vpack.c.bf16 %v130, %v130
    %s132 = scalar_lea.vmem [#allocation5], 16
    %v133 = vld [vmem:[%s132] sm:$0xf]
    %v134 = vld [vmem:[%s132 + $0x4] sm:$0xf]
    %v135 = vld [vmem:[%s132 + $0x8] sm:$0xf]
    %v136 = vld [vmem:[%s132 + $0xc] sm:$0xf]
    %s137 = scalar_lea.vmem %s2, 1
    %v138 = vld [vmem:[%s137] sm:$0x1]
    %v140 = vlaneseq
    %v141 = vshrl.u32 %v140, 7
    %v142 = vsub.s32 0, %v141
    %v143 = vrot.slane %v138, %v142
    %v149 = vunpack.c.l.b16 %v133
    %v150 = vunpack.c.l.b16 %v134
    %v151 = vunpack.c.l.b16 %v135
    %v152 = vunpack.c.l.b16 %v136
    %v153 = vpack.c.b16 %v150, %v149
    %v154 = vpack.c.b16 %v152, %v151
    %v158 = vsel %vm86, %v131, 0
    %160 = vmatprep.subr.bf16.mxu0 0
    %161 = vmatpush1.bf16.msra.mxu0 %v153
    %162 = vmatprep.subr.bf16.mxu0 0
    %163 = vmatpush1.bf16.msra.mxu0 %v154
    %164 = vmatprep.subr.bf16.mxu0 0
    %165 = vmatpush1.bf16.msra.mxu0 0
    %166 = vmatprep.subr.bf16.mxu0 0
    %167 = vmatpush1.bf16.msra.mxu0 0
    %168 = vmatprep.subr.bf16.mxu0 0
    %169 = vmatpush1.bf16.msra.mxu0 0
    %170 = vmatprep.subr.bf16.mxu0 0
    %171 = vmatpush1.bf16.msra.mxu0 0
    %172 = vmatprep.subr.bf16.mxu0 0
    %173 = vmatpush1.bf16.msra.mxu0 0
    %174 = vmatprep.subr.bf16.mxu0 0
    %175 = vmatpush1.bf16.msra.mxu0 0
    %176 = vmatprep.subr.bf16.mxu0 0
    %177 = vmatpush1.bf16.msra.mxu0 0
    %178 = vmatprep.subr.bf16.mxu0 0
    %179 = vmatpush1.bf16.msra.mxu0 0
    %180 = vmatprep.subr.bf16.mxu0 0
    %181 = vmatpush1.bf16.msra.mxu0 0
    %182 = vmatprep.subr.bf16.mxu0 0
    %183 = vmatpush1.bf16.msra.mxu0 0
    %184 = vmatprep.subr.bf16.mxu0 0
    %185 = vmatpush1.bf16.msra.mxu0 0
    %186 = vmatprep.subr.bf16.mxu0 0
    %187 = vmatpush1.bf16.msra.mxu0 0
    %188 = vmatprep.subr.bf16.mxu0 0
    %189 = vmatpush1.bf16.msra.mxu0 0
    %190 = vmatprep.subr.bf16.mxu0 0
    %191 = vmatpush1.bf16.msra.mxu0 0
    %192 = vmatprep.mubr.bf16.mxu0 0
    %193 = vmatmul.mubr.bf16.gmra.mrb[0].mxu0 %v158
    %v194 = vpop.f32.mrb[0].mxu0
    %v195 = vadd.f32 %v143, %v194
    %v196 = vpop.f32.mrb[0].mxu0
    %v197 = vpop.f32.mrb[0].mxu0
    %v198 = vpop.f32.mrb[0].mxu0
    %199 = vdwg.mxu0
    %v200 = vmax.f32 %v195, 0.0
    %v201 = vpack.c.bf16 %v200, %v200
    %v202 = vld [vmem:[#allocation7] sm:$0xf]
    %v203 = vld [vmem:[#allocation7 + $0x4] sm:$0xf]
    %v204 = vld [vmem:[#allocation7 + $0x8] sm:$0xf]
    %v205 = vld [vmem:[#allocation7 + $0xc] sm:$0xf]
    %v206 = vld [vmem:[%s4] sm:$0x1]
    %v208 = vlaneseq
    %v209 = vshrl.u32 %v208, 7
    %v210 = vsub.s32 0, %v209
    %v211 = vrot.slane %v206, %v210
    %v217 = vunpack.c.l.b16 %v202
    %v218 = vunpack.c.l.b16 %v203
    %v219 = vunpack.c.l.b16 %v204
    %v220 = vunpack.c.l.b16 %v205
    %v221 = vpack.c.b16 %v218, %v217
    %v222 = vpack.c.b16 %v220, %v219
    %v226 = vsel %vm86, %v201, 0
    %228 = vmatprep.subr.bf16.mxu0 0
    %229 = vmatpush1.bf16.msra.mxu0 %v221
    %230 = vmatprep.subr.bf16.mxu0 0
    %231 = vmatpush1.bf16.msra.mxu0 %v222
    %232 = vmatprep.subr.bf16.mxu0 0
    %233 = vmatpush1.bf16.msra.mxu0 0
    %234 = vmatprep.subr.bf16.mxu0 0
    %235 = vmatpush1.bf16.msra.mxu0 0
    %236 = vmatprep.subr.bf16.mxu0 0
    %237 = vmatpush1.bf16.msra.mxu0 0
    %238 = vmatprep.subr.bf16.mxu0 0
    %239 = vmatpush1.bf16.msra.mxu0 0
    %240 = vmatprep.subr.bf16.mxu0 0
    %241 = vmatpush1.bf16.msra.mxu0 0
    %242 = vmatprep.subr.bf16.mxu0 0
    %243 = vmatpush1.bf16.msra.mxu0 0
    %244 = vmatprep.subr.bf16.mxu0 0
    %245 = vmatpush1.bf16.msra.mxu0 0
    %246 = vmatprep.subr.bf16.mxu0 0
    %247 = vmatpush1.bf16.msra.mxu0 0
    %248 = vmatprep.subr.bf16.mxu0 0
    %249 = vmatpush1.bf16.msra.mxu0 0
    %250 = vmatprep.subr.bf16.mxu0 0
    %251 = vmatpush1.bf16.msra.mxu0 0
    %252 = vmatprep.subr.bf16.mxu0 0
    %253 = vmatpush1.bf16.msra.mxu0 0
    %254 = vmatprep.subr.bf16.mxu0 0
    %255 = vmatpush1.bf16.msra.mxu0 0
    %256 = vmatprep.subr.bf16.mxu0 0
    %257 = vmatpush1.bf16.msra.mxu0 0
    %258 = vmatprep.subr.bf16.mxu0 0
    %259 = vmatpush1.bf16.msra.mxu0 0
    %260 = vmatprep.mubr.bf16.mxu0 0
    %261 = vmatmul.mubr.bf16.gmra.mrb[0].mxu0 %v226
    %v262 = vpop.f32.mrb[0].mxu0
    %v263 = vadd.f32 %v211, %v262
    %v264 = vpop.f32.mrb[0].mxu0
    %v265 = vpop.f32.mrb[0].mxu0
    %v266 = vpop.f32.mrb[0].mxu0
    %267 = vdwg.mxu0
    %v268 = vsub.f32 0.0, %v263
    %v269 = vmul.f32 %v268, 1.442695
    %v270 = vpow.pop %v269
    %v271 = vadd.f32 %v270, 1.0
    %v272 = vrcp.pop %v271
    %273 = vst [vmem:[#allocation8] sm:$0xff] %v272
    // Predicated region
    $region34: #{tpu_custom_call.1} parent=1 // pred_check
      _
    $region35: #{tpu_custom_call.1} parent=1 // pred_check_branch
      %275 = sbr.rel (0) target = $region37
    $region36: #{tpu_custom_call.1} parent=1 // pred_region
      %s277 = ssub.s32 128, 128
      %278 = vsyncadd [#allocation4], %s277
      %s280 = sshll.u32 [#allocation8], 4
      %s281 = int_to_ptr.vmem [resolvable:$true] %s280
      %283 = dma.vmem_to_hbm [thread:$0]  %s281, 128, %s5, [#allocation4]
    $region37: #{tpu_custom_call.1} parent=1 // pred_fallthru
      _
    // Predicated region
    $region38: #{tpu_custom_call.1} parent=1 // pred_check
      _
    $region39: #{tpu_custom_call.1} parent=1 // pred_check_branch
      %285 = sbr.rel (0) target = $region41
    $region40: #{tpu_custom_call.1} parent=1 // pred_region
      %286 = dma.done [#allocation4], 128
    $region41: #{tpu_custom_call.1} parent=1 // pred_fallthru
      _
    %287 = vsyncpa [#allocation3], 1
    %288 = vsyncpa [#allocation6], 1
    %289 = vsyncpa [#allocation4], 1

</llo_original>
